<compile_context>
chip_gen: v6e
topology: v6e:2x2x1
jax: 0.10.0
libtpu: 0.0.40
codegen_flags: <defaults>
</compile_context>

<pallas_src>
import jax
import jax.numpy as jnp
import numpy as np
from jax.experimental import pallas as pl
from jax.experimental.pallas import tpu as pltpu


def _make_sap_kernel(has_mask: bool):
    def kernel(*refs):
        if has_mask:
            x_ref, w_ref, b_ref, mask_ref, o_ref = refs
        else:
            x_ref, w_ref, b_ref, o_ref = refs

        x = x_ref[...]                                          # (Bn, T, H)
        bn, t, h = x.shape
        w_row = w_ref[...].reshape(1, 1, h).astype(x.dtype)     # (1, 1, H)
        b = b_ref[0, 0]                                         # scalar (SMEM)

        # att_logits = batch_rep @ W^T + b   -> (Bn, T)
        # VPU multiply + XLU lane-reduce: avoids a width-1 MXU matvec and an
        # f32 copy of the whole (Bn, T, H) tile.
        logits = jnp.sum(x * w_row, axis=-1, dtype=jnp.float32) + b

        if has_mask:
            # masked_fill(att_mask, 1e-20) -- fills with 1e-20 (not -inf),
            # exactly mirroring the PyTorch module.
            m = mask_ref[...]                                   # (Bn, T)
            logits = jnp.where(m > 0.5, jnp.float32(1e-20), logits)

        # softmax over the sequence axis (lanes)
        mx = jnp.max(logits, axis=-1, keepdims=True)            # (Bn, 1)
        p = jnp.exp(logits - mx)                                # (Bn, T)
        s = jnp.sum(p, axis=-1, keepdims=True)                  # (Bn, 1)
        att_w = p * pl.reciprocal(s, approx=True)               # (Bn, T)

        # utter_rep[b] = att_w[b] @ batch_rep[b]  -> (Bn, H); MXU, f32 accum.
        out = jnp.einsum(
            "bqt,bth->bqh",
            att_w.reshape(bn, 1, t).astype(x.dtype),
            x,
            preferred_element_type=jnp.float32,
        )                                                       # (Bn, 1, H)
        o_ref[...] = out[:, 0, :].astype(o_ref.dtype)

    return kernel


def _choose_block_n(n, t, h, itemsize, vmem_budget_bytes=24 * 1024 * 1024):
    """Largest Bn (multiple of 8) whose double-buffered blocks fit the budget."""
    per_elem = 2 * (t * h * itemsize) + 2 * (t * 4) + 2 * (h * itemsize)
    bn = max(1, vmem_budget_bytes // per_elem)
    if n > 8:
        # keep >= 2 grid steps so both v7x TensorCores get work
        bn = min(bn, pl.cdiv(n, 2))
    bn = max(8, (bn // 8) * 8)                  # sublane multiple
    bn = min(bn, ((n + 7) // 8) * 8)            # no bigger than padded N
    return int(bn)


def self_attention_pooling(batch_rep, weight, bias, att_mask=None,
                           block_n=None, vmem_limit_bytes=32 * 1024 * 1024):
    """batch_rep: (N, T, H); weight: (1, H); bias: (1,); att_mask: (N, T) bool or None.
    Returns (N, H) -- same forward semantics as the PyTorch module."""
    n, t, h = batch_rep.shape
    itemsize = jnp.dtype(batch_rep.dtype).itemsize
    bn = int(block_n) if block_n is not None else _choose_block_n(n, t, h, itemsize)
    n_pad = pl.cdiv(n, bn) * bn

    x = batch_rep
    if n_pad != n:
        x = jnp.pad(x, ((0, n_pad - n), (0, 0), (0, 0)))

    w2 = jnp.asarray(weight).reshape(1, h)
    b2 = jnp.asarray(bias, jnp.float32).reshape(1, 1)

    has_mask = att_mask is not None
    in_specs = [
        pl.BlockSpec((bn, t, h), lambda i: (i, 0, 0)),
        pl.BlockSpec((1, h), lambda i: (0, 0)),
        pl.BlockSpec(memory_space=pltpu.MemorySpace.SMEM),
    ]
    args = [x, w2, b2]
    if has_mask:
        mask = att_mask.astype(jnp.float32)                     # (N, T), T on lanes
        if n_pad != n:
            mask = jnp.pad(mask, ((0, n_pad - n), (0, 0)))      # padded rows unmasked
        in_specs.append(pl.BlockSpec((bn, t), lambda i: (i, 0)))
        args.append(mask)

    out = pl.pallas_call(
        _make_sap_kernel(has_mask),
        out_shape=jax.ShapeDtypeStruct((n_pad, h), batch_rep.dtype),
        grid_spec=pltpu.PrefetchScalarGridSpec(
            num_scalar_prefetch=0,
            grid=(n_pad // bn,),
            in_specs=in_specs,
            out_specs=pl.BlockSpec((bn, h), lambda i: (i, 0)),
        ),
        compiler_params=pltpu.CompilerParams(
            dimension_semantics=("parallel",),
            vmem_limit_bytes=vmem_limit_bytes,
        ),
    )(*args)
    return out[:n]


def _reference(batch_rep, weight, bias, att_mask=None):
    # Pure-JAX reference mirroring the PyTorch forward.
    logits = jnp.einsum("nth,h->nt", batch_rep, weight[0]) + bias[0]
    if att_mask is not None:
        logits = jnp.where(att_mask, jnp.float32(1e-20), logits)
    att_w = jax.nn.softmax(logits, axis=-1)[..., None]
    return jnp.sum(batch_rep * att_w, axis=1)


if __name__ == "__main__":
    key = jax.random.PRNGKey(0)
    k_x, k_w, k_b, k_m, k_x2, k_m2 = jax.random.split(key, 6)

    # small shapes consistent with the module: N=6, T=16, H=32
    N, T, H = 6, 16, 32
    batch_rep = jax.random.normal(k_x, (N, T, H), dtype=jnp.float32)
    # nn.Linear(H, 1): weight (1, H), bias (1,)
    weight = jax.random.normal(k_w, (1, H), dtype=jnp.float32) * (1.0 / np.sqrt(H))
    bias = jax.random.normal(k_b, (1,), dtype=jnp.float32) * 0.1
    att_mask = jax.random.uniform(k_m, (N, T)) < 0.3            # boolean mask

    # tolerance slightly loosened because the softmax denominator uses the
    # EUP approximate reciprocal (pl.reciprocal(approx=True)).
    tol = dict(rtol=5e-3, atol=5e-3)

    # masked path (exercises N-padding: N=6 -> padded to 8)
    out_masked = jax.block_until_ready(
        self_attention_pooling(batch_rep, weight, bias, att_mask))
    np.testing.assert_allclose(
        np.asarray(out_masked),
        np.asarray(_reference(batch_rep, weight, bias, att_mask)), **tol)

    # unmasked path (separate kernel variant, no mask DMA)
    out_plain = jax.block_until_ready(
        self_attention_pooling(batch_rep, weight, bias, None))
    np.testing.assert_allclose(
        np.asarray(out_plain),
        np.asarray(_reference(batch_rep, weight, bias, None)), **tol)

    # a case that exercises >1 grid step (N=16 -> Bn=8, grid=(2,))
    N2 = 16
    batch_rep2 = jax.random.normal(k_x2, (N2, T, H), dtype=jnp.float32)
    att_mask2 = jax.random.uniform(k_m2, (N2, T)) < 0.3
    out2 = jax.block_until_ready(
        self_attention_pooling(batch_rep2, weight, bias, att_mask2))
    np.testing.assert_allclose(
        np.asarray(out2),
        np.asarray(_reference(batch_rep2, weight, bias, att_mask2)), **tol)

    print("KERNEL_OK")
</pallas_src>

<mosaic_0001>
module attributes {stable_mosaic.version = 11 : i64} {
  func.func @kernel(%arg0: i32, %arg1: memref<8x16x32xf32, #tpu.memory_space<vmem>>, %arg2: memref<1x32xf32, #tpu.memory_space<vmem>>, %arg3: memref<1x1xf32, #tpu.memory_space<smem>>, %arg4: memref<8x16xf32, #tpu.memory_space<vmem>>, %arg5: memref<8x32xf32, #tpu.memory_space<vmem>>) attributes {dimension_semantics = [#tpu.dimension_semantics<parallel>], iteration_bounds = array<i64: 1>, scalar_prefetch = 0 : i64, scratch_operands = 0 : i64, tpu.core_type = #tpu.core_type<tc>, window_params = [{transform_indices = @transform_0, window_bounds = array<i64: 8, 16, 32>}, {pipeline_mode = #tpu.pipeline_mode<synchronous>, transform_indices = @transform_1, window_bounds = array<i64: 1, 32>}, {transform_indices = @transform_2, window_bounds = array<i64: 1, 1>}, {transform_indices = @transform_3, window_bounds = array<i64: 8, 16>}, {transform_indices = @transform_4, window_bounds = array<i64: 8, 32>}]} {
    %c0 = arith.constant 0 : index
    %c0_0 = arith.constant 0 : index
    %c0_1 = arith.constant 0 : index
    %0 = vector.load %arg1[%c0, %c0_0, %c0_1] : memref<8x16x32xf32, #tpu.memory_space<vmem>>, vector<8x16x32xf32>
    %c0_2 = arith.constant 0 : index
    %c0_3 = arith.constant 0 : index
    %1 = vector.load %arg2[%c0_2, %c0_3] : memref<1x32xf32, #tpu.memory_space<vmem>>, vector<1x32xf32>
    %2 = vector.shape_cast %1 : vector<1x32xf32> to vector<1x1x32xf32>
    %c0_4 = arith.constant 0 : index
    %c0_5 = arith.constant 0 : index
    %3 = memref.load %arg3[%c0_4, %c0_5] : memref<1x1xf32, #tpu.memory_space<smem>>
    %4 = vector.broadcast %2 : vector<1x1x32xf32> to vector<8x16x32xf32>
    %5 = arith.mulf %0, %4 : vector<8x16x32xf32>
    %cst = arith.constant dense<0.000000e+00> : vector<8x16xf32>
    %6 = vector.multi_reduction <add>, %5, %cst [2] : vector<8x16x32xf32> to vector<8x16xf32>
    %7 = vector.broadcast %3 : f32 to vector<8x16xf32>
    %8 = arith.addf %6, %7 : vector<8x16xf32>
    %c0_6 = arith.constant 0 : index
    %c0_7 = arith.constant 0 : index
    %9 = vector.load %arg4[%c0_6, %c0_7] : memref<8x16xf32, #tpu.memory_space<vmem>>, vector<8x16xf32>
    %cst_8 = arith.constant 5.000000e-01 : f32
    %10 = vector.broadcast %cst_8 : f32 to vector<8x16xf32>
    %11 = arith.cmpf ogt, %9, %10 : vector<8x16xf32>
    %cst_9 = arith.constant 9.99999968E-21 : f32
    %12 = vector.broadcast %cst_9 : f32 to vector<8x16xf32>
    %13 = arith.select %11, %12, %8 : vector<8x16xi1>, vector<8x16xf32>
    %cst_10 = arith.constant dense<0xFF800000> : vector<8xf32>
    %14 = vector.multi_reduction <maximumf>, %13, %cst_10 [1] : vector<8x16xf32> to vector<8xf32>
    %15 = vector.shape_cast %14 : vector<8xf32> to vector<8x1xf32>
    %16 = vector.broadcast %15 : vector<8x1xf32> to vector<8x16xf32>
    %17 = arith.subf %13, %16 : vector<8x16xf32>
    %18 = math.exp %17 : vector<8x16xf32>
    %cst_11 = arith.constant dense<0.000000e+00> : vector<8xf32>
    %19 = vector.multi_reduction <add>, %18, %cst_11 [1] : vector<8x16xf32> to vector<8xf32>
    %20 = vector.shape_cast %19 : vector<8xf32> to vector<8x1xf32>
    %21 = tpu.reciprocal %20 {approx = true} : vector<8x1xf32> -> vector<8x1xf32>
    %22 = vector.broadcast %21 : vector<8x1xf32> to vector<8x16xf32>
    %23 = arith.mulf %18, %22 : vector<8x16xf32>
    %24 = vector.shape_cast %23 : vector<8x16xf32> to vector<8x1x16xf32>
    "tpu.trace_start"() <{level = 10 : i32, message = "bqt,bth->bqh"}> : () -> ()
    %cst_12 = arith.constant dense<0.000000e+00> : vector<8x1x32xf32>
    %25 = tpu.matmul %24, %0, %cst_12 {dimension_numbers = #tpu.dot_dimension_numbers<[2], [1], [1], [2], [0, 0, 0, 1, 1, 2], [0], [0]>} : vector<8x1x16xf32>, vector<8x16x32xf32>, vector<8x1x32xf32> -> vector<8x1x32xf32>
    "tpu.trace_stop"() : () -> ()
    %26 = vector.shape_cast %25 : vector<8x1x32xf32> to vector<8x32xf32>
    %c0_13 = arith.constant 0 : index
    %c0_14 = arith.constant 0 : index
    %27 = vector.load %arg5[%c0_13, %c0_14] : memref<8x32xf32, #tpu.memory_space<vmem>>, vector<8x32xf32>
    tpu.vector_store %arg5[%c0_13, %c0_14], %26 {strides = array<i32>} : memref<8x32xf32, #tpu.memory_space<vmem>>, vector<8x32xf32>,
    return
  }
  func.func @transform_0(%arg0: i32) -> (i32, i32, i32) {
    %c0_i32 = arith.constant 0 : i32
    %c0_i32_0 = arith.constant 0 : i32
    %c0_i32_1 = arith.constant 0 : i32
    return %arg0, %c0_i32, %c0_i32_0 : i32, i32, i32
  }
  func.func @transform_1(%arg0: i32) -> (i32, i32) {
    %c0_i32 = arith.constant 0 : i32
    %c0_i32_0 = arith.constant 0 : i32
    %c0_i32_1 = arith.constant 0 : i32
    return %c0_i32, %c0_i32_0 : i32, i32
  }
  func.func @transform_2(%arg0: i32) -> (i32, i32) {
    %c0_i32 = arith.constant 0 : i32
    %c0_i32_0 = arith.constant 0 : i32
    %c0_i32_1 = arith.constant 0 : i32
    return %c0_i32, %c0_i32_0 : i32, i32
  }
  func.func @transform_3(%arg0: i32) -> (i32, i32) {
    %c0_i32 = arith.constant 0 : i32
    %c0_i32_0 = arith.constant 0 : i32
    return %arg0, %c0_i32 : i32, i32
  }
  func.func @transform_4(%arg0: i32) -> (i32, i32) {
    %c0_i32 = arith.constant 0 : i32
    %c0_i32_0 = arith.constant 0 : i32
    return %arg0, %c0_i32 : i32, i32
  }
}

</mosaic_0001>

<llo_original>
// kernel: tpu_custom_call.1
$region0: #{tpu_custom_call.1}
  #allocation0 [shape = 'u32[]', space=smem, size = 0x4, offset = 0x4, fixed_abs, tag = 'smem constant byte address 0x4 - core index']
  #allocation1 [shape = 'u32[144,128]{1,0:T(1,128)}', space=vmem, size = 0x12000, scoped, tag = 'internal scratch']
  #allocation2 [shape = 'f32[1,1]{1,0:T(1,128)S(6)}', space=smem, size = 0x200, scoped, tag = 'scoped memory for tpu_custom_call.1']
  %s0 = inlined_call_operand.hbm [shape: f32[8,16,32], index: 0, kind: input, shape index: {}]
  %s1 = inlined_call_operand.vmem [shape: f32[1,32], index: 1, kind: input, shape index: {}]
  %s2 = inlined_call_operand.<no memory space> [shape: f32[1,1], index: 2, kind: input, shape index: {}]
  %s3 = inlined_call_operand.hbm [shape: f32[8,16], index: 3, kind: input, shape index: {}]
  %s4 = inlined_call_operand.hbm [shape: f32[8,32], index: 4, kind: output, shape index: {}]
  %s5 = sld [smem:[#allocation0]]
  $region34: #{tpu_custom_call.1} parent=0
    _
  %s7 = ssub.s32 1, %s5
  %s8 = scalar_select 0, %s7, %s5
  %9 = sst [smem:[#allocation2]] %s2
  $region1: #{tpu_custom_call.1} parent=0
    #allocation3 [shape = 'u8[65536]{0}', space=vmem, size = 0x10000, scoped, tag = 'input window, operand 0, single buffered']
    #allocation4 [shape = 's32[1]{0}', space=sflag, size = 0x4, scoped, tag = 'scoped memory for tpu_custom_call.1']
    #allocation5 [shape = 's32[1]{0}', space=sflag, size = 0x4, scoped, tag = 'scoped memory for tpu_custom_call.1']
    #allocation6 [shape = 'u8[4096]{0}', space=vmem, size = 0x1000, scoped, tag = 'input window, operand 3, single buffered']
    #allocation7 [shape = 's32[1]{0}', space=sflag, size = 0x4, scoped, tag = 'scoped memory for tpu_custom_call.1']
    #allocation8 [shape = 'u8[4096]{0}', space=vmem, size = 0x1000, scoped, tag = 'output window, operand 0, single buffered']
    %10 = vsyncpa [#allocation4], 0
    %11 = vsyncpa [#allocation7], 0
    %12 = vsyncpa [#allocation5], 0
    // Predicated region
    $region2: #{tpu_custom_call.1} parent=1 // pred_check
      _
    $region3: #{tpu_custom_call.1} parent=1 // pred_check_branch
      %14 = sbr.rel (0) target = $region5
    $region4: #{tpu_custom_call.1} parent=1 // pred_region
      %s16 = ssub.s32 2048, 2048
      %17 = vsyncadd [#allocation4], %s16
      %s18 = sshll.u32 [#allocation3], 4
      %s19 = int_to_ptr.vmem [resolvable:$true] %s18
      %24 = dma.hbm_to_vmem [thread:$0]  %s0, 2048, %s19, [#allocation4], 128, 128, 8
    $region5: #{tpu_custom_call.1} parent=1 // pred_fallthru
      _
    // Predicated region
    $region6: #{tpu_custom_call.1} parent=1 // pred_check
      _
    $region7: #{tpu_custom_call.1} parent=1 // pred_check_branch
      %26 = sbr.rel (0) target = $region9
    $region8: #{tpu_custom_call.1} parent=1 // pred_region
      _
    $region9: #{tpu_custom_call.1} parent=1 // pred_fallthru
      _
    // Predicated region
    $region10: #{tpu_custom_call.1} parent=1 // pred_check
      _
    $region11: #{tpu_custom_call.1} parent=1 // pred_check_branch
      %28 = sbr.rel (0) target = $region13
    $region12: #{tpu_custom_call.1} parent=1 // pred_region
      _
    $region13: #{tpu_custom_call.1} parent=1 // pred_fallthru
      _
    // Predicated region
    $region14: #{tpu_custom_call.1} parent=1 // pred_check
      _
    $region15: #{tpu_custom_call.1} parent=1 // pred_check_branch
      %30 = sbr.rel (0) target = $region17
    $region16: #{tpu_custom_call.1} parent=1 // pred_region
      %s32 = ssub.s32 128, 128
      %33 = vsyncadd [#allocation7], %s32
      %s35 = sshll.u32 [#allocation6], 4
      %s36 = int_to_ptr.vmem [resolvable:$true] %s35
      %38 = dma.hbm_to_vmem [thread:$0]  %s3, 128, %s36, [#allocation7]
    $region17: #{tpu_custom_call.1} parent=1 // pred_fallthru
      _
    // Predicated region
    $region18: #{tpu_custom_call.1} parent=1 // pred_check
      _
    $region19: #{tpu_custom_call.1} parent=1 // pred_check_branch
      %40 = sbr.rel (0) target = $region21
    $region20: #{tpu_custom_call.1} parent=1 // pred_region
      %41 = dma.done [#allocation4], 2048
    $region21: #{tpu_custom_call.1} parent=1 // pred_fallthru
      _
    // Predicated region
    $region22: #{tpu_custom_call.1} parent=1 // pred_check
      _
    $region23: #{tpu_custom_call.1} parent=1 // pred_check_branch
      %43 = sbr.rel (0) target = $region25
    $region24: #{tpu_custom_call.1} parent=1 // pred_region
      %44 = dma.done [#allocation7], 128
    $region25: #{tpu_custom_call.1} parent=1 // pred_fallthru
      _
    %v45 = vld [vmem:[#allocation3] sm:$0xff]
    %v46 = vld [vmem:[#allocation3 + $0x8] sm:$0xff]
    %v47 = vld [vmem:[#allocation3 + $0x10] sm:$0xff]
    %v48 = vld [vmem:[#allocation3 + $0x18] sm:$0xff]
    %v49 = vld [vmem:[#allocation3 + $0x20] sm:$0xff]
    %v50 = vld [vmem:[#allocation3 + $0x28] sm:$0xff]
    %v51 = vld [vmem:[#allocation3 + $0x30] sm:$0xff]
    %v52 = vld [vmem:[#allocation3 + $0x38] sm:$0xff]
    %v53 = vld [vmem:[#allocation3 + $0x40] sm:$0xff]
    %v54 = vld [vmem:[#allocation3 + $0x48] sm:$0xff]
    %v55 = vld [vmem:[#allocation3 + $0x50] sm:$0xff]
    %v56 = vld [vmem:[#allocation3 + $0x58] sm:$0xff]
    %v57 = vld [vmem:[#allocation3 + $0x60] sm:$0xff]
    %v58 = vld [vmem:[#allocation3 + $0x68] sm:$0xff]
    %v59 = vld [vmem:[#allocation3 + $0x70] sm:$0xff]
    %v60 = vld [vmem:[#allocation3 + $0x78] sm:$0xff]
    %v61 = vld [vmem:[%s1] sm:$0x1]
    %s62 = sld [smem:[#allocation2]]
    %v64 = vlaneseq
    %v65 = vshrl.u32 %v64, 7
    %v66 = vsub.s32 0, %v65
    %v67 = vrot.slane %v61, %v66
    %v69 = vmul.f32 %v45, %v67
    %v70 = vmul.f32 %v46, %v67
    %v71 = vmul.f32 %v47, %v67
    %v72 = vmul.f32 %v48, %v67
    %v73 = vmul.f32 %v49, %v67
    %v74 = vmul.f32 %v50, %v67
    %v75 = vmul.f32 %v51, %v67
    %v76 = vmul.f32 %v52, %v67
    %v77 = vmul.f32 %v53, %v67
    %v78 = vmul.f32 %v54, %v67
    %v79 = vmul.f32 %v55, %v67
    %v80 = vmul.f32 %v56, %v67
    %v81 = vmul.f32 %v57, %v67
    %v82 = vmul.f32 %v58, %v67
    %v83 = vmul.f32 %v59, %v67
    %v84 = vmul.f32 %v60, %v67
    %vm85 = vcmask 261120
    %v86 = vsel %vm85, %v69, 0.0
    %87 = vadd.xlane.f32.xlu0 %v86
    %v88 = vpop.xlane.xlu0 %87
    %v89 = vsel %vm85, %v70, 0.0
    %90 = vadd.xlane.f32.xlu0 %v89
    %v91 = vpop.xlane.xlu0 %90
    %v92 = vsel %vm85, %v71, 0.0
    %93 = vadd.xlane.f32.xlu0 %v92
    %v94 = vpop.xlane.xlu0 %93
    %v95 = vsel %vm85, %v72, 0.0
    %96 = vadd.xlane.f32.xlu0 %v95
    %v97 = vpop.xlane.xlu0 %96
    %v98 = vsel %vm85, %v73, 0.0
    %99 = vadd.xlane.f32.xlu0 %v98
    %v100 = vpop.xlane.xlu0 %99
    %v101 = vsel %vm85, %v74, 0.0
    %102 = vadd.xlane.f32.xlu0 %v101
    %v103 = vpop.xlane.xlu0 %102
    %v104 = vsel %vm85, %v75, 0.0
    %105 = vadd.xlane.f32.xlu0 %v104
    %v106 = vpop.xlane.xlu0 %105
    %v107 = vsel %vm85, %v76, 0.0
    %108 = vadd.xlane.f32.xlu0 %v107
    %v109 = vpop.xlane.xlu0 %108
    %v110 = vsel %vm85, %v77, 0.0
    %111 = vadd.xlane.f32.xlu0 %v110
    %v112 = vpop.xlane.xlu0 %111
    %v113 = vsel %vm85, %v78, 0.0
    %114 = vadd.xlane.f32.xlu0 %v113
    %v115 = vpop.xlane.xlu0 %114
    %v116 = vsel %vm85, %v79, 0.0
    %117 = vadd.xlane.f32.xlu0 %v116
    %v118 = vpop.xlane.xlu0 %117
    %v119 = vsel %vm85, %v80, 0.0
    %120 = vadd.xlane.f32.xlu0 %v119
    %v121 = vpop.xlane.xlu0 %120
    %v122 = vsel %vm85, %v81, 0.0
    %123 = vadd.xlane.f32.xlu0 %v122
    %v124 = vpop.xlane.xlu0 %123
    %v125 = vsel %vm85, %v82, 0.0
    %126 = vadd.xlane.f32.xlu0 %v125
    %v127 = vpop.xlane.xlu0 %126
    %v128 = vsel %vm85, %v83, 0.0
    %129 = vadd.xlane.f32.xlu0 %v128
    %v130 = vpop.xlane.xlu0 %129
    %v131 = vsel %vm85, %v84, 0.0
    %132 = vadd.xlane.f32.xlu0 %v131
    %v133 = vpop.xlane.xlu0 %132
    %v134 = vstv %s62
    %v135 = vadd.f32 %v88, %v134
    %v136 = vadd.f32 %v91, %v134
    %v137 = vadd.f32 %v94, %v134
    %v138 = vadd.f32 %v97, %v134
    %v139 = vadd.f32 %v100, %v134
    %v140 = vadd.f32 %v103, %v134
    %v141 = vadd.f32 %v106, %v134
    %v142 = vadd.f32 %v109, %v134
    %v143 = vadd.f32 %v112, %v134
    %v144 = vadd.f32 %v115, %v134
    %v145 = vadd.f32 %v118, %v134
    %v146 = vadd.f32 %v121, %v134
    %v147 = vadd.f32 %v124, %v134
    %v148 = vadd.f32 %v127, %v134
    %v149 = vadd.f32 %v130, %v134
    %v150 = vadd.f32 %v133, %v134
    %v151 = vld [vmem:[#allocation6] sm:$0xff]
    %vm152 = vcmp.gt.f32.partialorder %v151, 0.5
    %v169 = vlaneseq
    %v170 = vand.u32 %v169, 127
    %v171 = vlaneseq
    %v172 = vshrl.u32 %v171, 7
    %v173 = vsub.s32 %v170, %v172
    %v174 = vrot.slane %v135, %v173
    %v175 = vadd.s32 %v170, 4294967288
    %v176 = vlaneseq
    %v177 = vshrl.u32 %v176, 7
    %v178 = vsub.s32 %v175, %v177
    %v179 = vrot.slane %v136, %v178
    %vm180 = vcmask 130112
    %v181 = vsel %vm180, %v179, %v174
    %v182 = vlaneseq
    %v183 = vshrl.u32 %v182, 7
    %v184 = vsub.s32 %v170, %v183
    %v185 = vrot.slane %v137, %v184
    %v186 = vlaneseq
    %v187 = vshrl.u32 %v186, 7
    %v188 = vsub.s32 %v175, %v187
    %v189 = vrot.slane %v138, %v188
    %v190 = vsel %vm180, %v189, %v185
    %v191 = vlaneseq
    %v192 = vshrl.u32 %v191, 7
    %v193 = vsub.s32 %v170, %v192
    %v194 = vrot.slane %v139, %v193
    %v195 = vlaneseq
    %v196 = vshrl.u32 %v195, 7
    %v197 = vsub.s32 %v175, %v196
    %v198 = vrot.slane %v140, %v197
    %v199 = vsel %vm180, %v198, %v194
    %v200 = vlaneseq
    %v201 = vshrl.u32 %v200, 7
    %v202 = vsub.s32 %v170, %v201
    %v203 = vrot.slane %v141, %v202
    %v204 = vlaneseq
    %v205 = vshrl.u32 %v204, 7
    %v206 = vsub.s32 %v175, %v205
    %v207 = vrot.slane %v142, %v206
    %v208 = vsel %vm180, %v207, %v203
    %v209 = vlaneseq
    %v210 = vshrl.u32 %v209, 7
    %v211 = vsub.s32 %v170, %v210
    %v212 = vrot.slane %v143, %v211
    %v213 = vlaneseq
    %v214 = vshrl.u32 %v213, 7
    %v215 = vsub.s32 %v175, %v214
    %v216 = vrot.slane %v144, %v215
    %v217 = vsel %vm180, %v216, %v212
    %v218 = vlaneseq
    %v219 = vshrl.u32 %v218, 7
    %v220 = vsub.s32 %v170, %v219
    %v221 = vrot.slane %v145, %v220
    %v222 = vlaneseq
    %v223 = vshrl.u32 %v222, 7
    %v224 = vsub.s32 %v175, %v223
    %v225 = vrot.slane %v146, %v224
    %v226 = vsel %vm180, %v225, %v221
    %v227 = vlaneseq
    %v228 = vshrl.u32 %v227, 7
    %v229 = vsub.s32 %v170, %v228
    %v230 = vrot.slane %v147, %v229
    %v231 = vlaneseq
    %v232 = vshrl.u32 %v231, 7
    %v233 = vsub.s32 %v175, %v232
    %v234 = vrot.slane %v148, %v233
    %v235 = vsel %vm180, %v234, %v230
    %v236 = vlaneseq
    %v237 = vshrl.u32 %v236, 7
    %v238 = vsub.s32 %v170, %v237
    %v239 = vrot.slane %v149, %v238
    %v240 = vlaneseq
    %v241 = vshrl.u32 %v240, 7
    %v242 = vsub.s32 %v175, %v241
    %v243 = vrot.slane %v150, %v242
    %v244 = vsel %vm180, %v243, %v239
    %vm245 = vcmask 1041409
    %v246 = vsel %vm245, %v190, %v181
    %vm247 = vcmask 1042434
    %v248 = vsel %vm247, %v199, %v246
    %vm249 = vcmask 1043459
    %v250 = vsel %vm249, %v208, %v248
    %vm251 = vcmask 1044484
    %v252 = vsel %vm251, %v217, %v250
    %vm253 = vcmask 1045509
    %v254 = vsel %vm253, %v226, %v252
    %vm255 = vcmask 1046534
    %v256 = vsel %vm255, %v235, %v254
    %vm257 = vcmask 1047559
    %v258 = vsel %vm257, %v244, %v256
    %v260 = vsel %vm152, 1e-20, %v258
    %vm261 = vcmask 130048
    %v262 = vsel %vm261, %v260, -inf
    %263 = vmax.xlane.f32.xlu0 %v262
    %v264 = vpop.xlane.xlu0 %263
    %v265 = vsub.f32 %v260, %v264
    %v266 = vmul.f32 %v265, 1.442695
    %v267 = vpow.pop %v266
    %v268 = vsel %vm261, %v267, 0.0
    %269 = vadd.xlane.f32.xlu0 %v268
    %v270 = vpop.xlane.xlu0 %269
    %v271 = vrcp.pop %v270
    %v272 = vmul.f32 %v267, %v271
    %v274 = vcombine.high %v272, %v272
    %v276 = vunpack.c.l.s4 1966171168
    %v277 = vunpack.c.0.s8 %v276
    %v278 = vlaneseq
    %v279 = vshrl.u32 %v278, 7
    %v280 = vsub.s32 %v277, %v279
    %v281 = vrot.slane %v272, %v280
    %v283 = vunpack.c.l.s4 1966171168
    %v284 = vunpack.c.0.s8 %v283
    %v285 = vlaneseq
    %v286 = vshrl.u32 %v285, 7
    %v287 = vsub.s32 %v284, %v286
    %v288 = vrot.slane %v274, %v287
    %v289 = vcombine.high %v281, %v281
    %v290 = vcombine.high %v288, %v288
    %v292 = vunpack.c.l.s4 1966171168
    %v293 = vunpack.c.0.s8 %v292
    %v294 = vlaneseq
    %v295 = vshrl.u32 %v294, 7
    %v296 = vsub.s32 %v293, %v295
    %v297 = vrot.slane %v281, %v296
    %v299 = vunpack.c.l.s4 1966171168
    %v300 = vunpack.c.0.s8 %v299
    %v301 = vlaneseq
    %v302 = vshrl.u32 %v301, 7
    %v303 = vsub.s32 %v300, %v302
    %v304 = vrot.slane %v288, %v303
    %v306 = vunpack.c.l.s4 1966171168
    %v307 = vunpack.c.0.s8 %v306
    %v308 = vlaneseq
    %v309 = vshrl.u32 %v308, 7
    %v310 = vsub.s32 %v307, %v309
    %v311 = vrot.slane %v289, %v310
    %v313 = vunpack.c.l.s4 1966171168
    %v314 = vunpack.c.0.s8 %v313
    %v315 = vlaneseq
    %v316 = vshrl.u32 %v315, 7
    %v317 = vsub.s32 %v314, %v316
    %v318 = vrot.slane %v290, %v317
    %v319 = vcombine.high %v297, %v297
    %v320 = vcombine.high %v304, %v304
    %v321 = vcombine.high %v311, %v311
    %v322 = vcombine.high %v318, %v318
    %v323 = vsel %vm261, %v297, 0
    %325 = vmatprep.subr.mxu0 0.0
    %326 = vmatpush1.msra.mxu0 0.0
    %327 = vmatprep.subr.mxu0 0.0
    %328 = vmatpush1.msra.mxu0 0.0
    %329 = vmatprep.subr.mxu0 0.0
    %330 = vmatpush1.msra.mxu0 0.0
    %331 = vmatprep.subr.mxu0 0.0
    %332 = vmatpush1.msra.mxu0 0.0
    %333 = vmatprep.subr.mxu0 0.0
    %334 = vmatpush1.msra.mxu0 0.0
    %335 = vmatprep.subr.mxu0 0.0
    %336 = vmatpush1.msra.mxu0 0.0
    %337 = vmatprep.subr.mxu0 0.0
    %338 = vmatpush1.msra.mxu0 0.0
    %339 = vmatprep.subr.mxu0 0.0
    %340 = vmatpush1.msra.mxu0 0.0
    %341 = vmatprep.subr.mxu0 0.0
    %342 = vmatpush1.msra.mxu0 0.0
    %343 = vmatprep.subr.mxu0 0.0
    %344 = vmatpush1.msra.mxu0 0.0
    %345 = vmatprep.subr.mxu0 0.0
    %346 = vmatpush1.msra.mxu0 0.0
    %347 = vmatprep.subr.mxu0 0.0
    %348 = vmatpush1.msra.mxu0 0.0
    %349 = vmatprep.subr.mxu0 0.0
    %350 = vmatpush1.msra.mxu0 0.0
    %351 = vmatprep.subr.mxu0 0.0
    %352 = vmatpush1.msra.mxu0 0.0
    %353 = vmatprep.subr.mxu0 0.0
    %354 = vmatpush1.msra.mxu0 %v46
    %355 = vmatprep.subr.mxu0 0.0
    %356 = vmatpush1.msra.mxu0 %v45
    %357 = vmatprep.subr.mxu0 0.0
    %358 = vmatpush2.msra.mxu0 0.0
    %359 = vmatprep.subr.mxu0 0.0
    %360 = vmatpush2.msra.mxu0 0.0
    %361 = vmatprep.subr.mxu0 0.0
    %362 = vmatpush2.msra.mxu0 0.0
    %363 = vmatprep.subr.mxu0 0.0
    %364 = vmatpush2.msra.mxu0 0.0
    %365 = vmatprep.subr.mxu0 0.0
    %366 = vmatpush2.msra.mxu0 0.0
    %367 = vmatprep.subr.mxu0 0.0
    %368 = vmatpush2.msra.mxu0 0.0
    %369 = vmatprep.subr.mxu0 0.0
    %370 = vmatpush2.msra.mxu0 0.0
    %371 = vmatprep.subr.mxu0 0.0
    %372 = vmatpush2.msra.mxu0 0.0
    %373 = vmatprep.subr.mxu0 0.0
    %374 = vmatpush2.msra.mxu0 0.0
    %375 = vmatprep.subr.mxu0 0.0
    %376 = vmatpush2.msra.mxu0 0.0
    %377 = vmatprep.subr.mxu0 0.0
    %378 = vmatpush2.msra.mxu0 0.0
    %379 = vmatprep.subr.mxu0 0.0
    %380 = vmatpush2.msra.mxu0 0.0
    %381 = vmatprep.subr.mxu0 0.0
    %382 = vmatpush2.msra.mxu0 0.0
    %383 = vmatprep.subr.mxu0 0.0
    %384 = vmatpush2.msra.mxu0 0.0
    %385 = vmatprep.subr.mxu0 0.0
    %386 = vmatpush2.msra.mxu0 0.0
    %387 = vmatprep.subr.mxu0 0.0
    %388 = vmatpush2.msra.mxu0 0.0
    %389 = vmatprep.mubr.f32.mxu0 0.0
    %390 = vmatmul.mubr.f32.gmra.mxu0 %v323
    %v391 = vpop.f32.mrf.mxu0
    %v392 = vadd.f32 0.0, %v391
    %v393 = vpop.f32.mrf.mxu0
    %394 = vdwg.mxu0
    %v395 = vsel %vm261, %v311, 0
    %397 = vmatprep.subr.mxu0 0.0
    %398 = vmatpush1.msra.mxu0 0.0
    %399 = vmatprep.subr.mxu0 0.0
    %400 = vmatpush1.msra.mxu0 0.0
    %401 = vmatprep.subr.mxu0 0.0
    %402 = vmatpush1.msra.mxu0 0.0
    %403 = vmatprep.subr.mxu0 0.0
    %404 = vmatpush1.msra.mxu0 0.0
    %405 = vmatprep.subr.mxu0 0.0
    %406 = vmatpush1.msra.mxu0 0.0
    %407 = vmatprep.subr.mxu0 0.0
    %408 = vmatpush1.msra.mxu0 0.0
    %409 = vmatprep.subr.mxu0 0.0
    %410 = vmatpush1.msra.mxu0 0.0
    %411 = vmatprep.subr.mxu0 0.0
    %412 = vmatpush1.msra.mxu0 0.0
    %413 = vmatprep.subr.mxu0 0.0
    %414 = vmatpush1.msra.mxu0 0.0
    %415 = vmatprep.subr.mxu0 0.0
    %416 = vmatpush1.msra.mxu0 0.0
    %417 = vmatprep.subr.mxu0 0.0
    %418 = vmatpush1.msra.mxu0 0.0
    %419 = vmatprep.subr.mxu0 0.0
    %420 = vmatpush1.msra.mxu0 0.0
    %421 = vmatprep.subr.mxu0 0.0
    %422 = vmatpush1.msra.mxu0 0.0
    %423 = vmatprep.subr.mxu0 0.0
    %424 = vmatpush1.msra.mxu0 0.0
    %425 = vmatprep.subr.mxu0 0.0
    %426 = vmatpush1.msra.mxu0 %v48
    %427 = vmatprep.subr.mxu0 0.0
    %428 = vmatpush1.msra.mxu0 %v47
    %429 = vmatprep.subr.mxu0 0.0
    %430 = vmatpush2.msra.mxu0 0.0
    %431 = vmatprep.subr.mxu0 0.0
    %432 = vmatpush2.msra.mxu0 0.0
    %433 = vmatprep.subr.mxu0 0.0
    %434 = vmatpush2.msra.mxu0 0.0
    %435 = vmatprep.subr.mxu0 0.0
    %436 = vmatpush2.msra.mxu0 0.0
    %437 = vmatprep.subr.mxu0 0.0
    %438 = vmatpush2.msra.mxu0 0.0
    %439 = vmatprep.subr.mxu0 0.0
    %440 = vmatpush2.msra.mxu0 0.0
    %441 = vmatprep.subr.mxu0 0.0
    %442 = vmatpush2.msra.mxu0 0.0
    %443 = vmatprep.subr.mxu0 0.0
    %444 = vmatpush2.msra.mxu0 0.0
    %445 = vmatprep.subr.mxu0 0.0
    %446 = vmatpush2.msra.mxu0 0.0
    %447 = vmatprep.subr.mxu0 0.0
    %448 = vmatpush2.msra.mxu0 0.0
    %449 = vmatprep.subr.mxu0 0.0
    %450 = vmatpush2.msra.mxu0 0.0
    %451 = vmatprep.subr.mxu0 0.0
    %452 = vmatpush2.msra.mxu0 0.0
    %453 = vmatprep.subr.mxu0 0.0
    %454 = vmatpush2.msra.mxu0 0.0
    %455 = vmatprep.subr.mxu0 0.0
    %456 = vmatpush2.msra.mxu0 0.0
    %457 = vmatprep.subr.mxu0 0.0
    %458 = vmatpush2.msra.mxu0 0.0
    %459 = vmatprep.subr.mxu0 0.0
    %460 = vmatpush2.msra.mxu0 0.0
    %461 = vmatprep.mubr.f32.mxu0 0.0
    %462 = vmatmul.mubr.f32.gmra.mxu0 %v395
    %v463 = vpop.f32.mrf.mxu0
    %v464 = vadd.f32 0.0, %v463
    %v465 = vpop.f32.mrf.mxu0
    %466 = vdwg.mxu0
    %v467 = vsel %vm261, %v319, 0
    %469 = vmatprep.subr.mxu0 0.0
    %470 = vmatpush1.msra.mxu0 0.0
    %471 = vmatprep.subr.mxu0 0.0
    %472 = vmatpush1.msra.mxu0 0.0
    %473 = vmatprep.subr.mxu0 0.0
    %474 = vmatpush1.msra.mxu0 0.0
    %475 = vmatprep.subr.mxu0 0.0
    %476 = vmatpush1.msra.mxu0 0.0
    %477 = vmatprep.subr.mxu0 0.0
    %478 = vmatpush1.msra.mxu0 0.0
    %479 = vmatprep.subr.mxu0 0.0
    %480 = vmatpush1.msra.mxu0 0.0
    %481 = vmatprep.subr.mxu0 0.0
    %482 = vmatpush1.msra.mxu0 0.0
    %483 = vmatprep.subr.mxu0 0.0
    %484 = vmatpush1.msra.mxu0 0.0
    %485 = vmatprep.subr.mxu0 0.0
    %486 = vmatpush1.msra.mxu0 0.0
    %487 = vmatprep.subr.mxu0 0.0
    %488 = vmatpush1.msra.mxu0 0.0
    %489 = vmatprep.subr.mxu0 0.0
    %490 = vmatpush1.msra.mxu0 0.0
    %491 = vmatprep.subr.mxu0 0.0
    %492 = vmatpush1.msra.mxu0 0.0
    %493 = vmatprep.subr.mxu0 0.0
    %494 = vmatpush1.msra.mxu0 0.0
    %495 = vmatprep.subr.mxu0 0.0
    %496 = vmatpush1.msra.mxu0 0.0
    %497 = vmatprep.subr.mxu0 0.0
    %498 = vmatpush1.msra.mxu0 %v50
    %499 = vmatprep.subr.mxu0 0.0
    %500 = vmatpush1.msra.mxu0 %v49
    %501 = vmatprep.subr.mxu0 0.0
    %502 = vmatpush2.msra.mxu0 0.0
    %503 = vmatprep.subr.mxu0 0.0
    %504 = vmatpush2.msra.mxu0 0.0
    %505 = vmatprep.subr.mxu0 0.0
    %506 = vmatpush2.msra.mxu0 0.0
    %507 = vmatprep.subr.mxu0 0.0
    %508 = vmatpush2.msra.mxu0 0.0
    %509 = vmatprep.subr.mxu0 0.0
    %510 = vmatpush2.msra.mxu0 0.0
    %511 = vmatprep.subr.mxu0 0.0
    %512 = vmatpush2.msra.mxu0 0.0
    %513 = vmatprep.subr.mxu0 0.0
    %514 = vmatpush2.msra.mxu0 0.0
    %515 = vmatprep.subr.mxu0 0.0
    %516 = vmatpush2.msra.mxu0 0.0
    %517 = vmatprep.subr.mxu0 0.0
    %518 = vmatpush2.msra.mxu0 0.0
    %519 = vmatprep.subr.mxu0 0.0
    %520 = vmatpush2.msra.mxu0 0.0
    %521 = vmatprep.subr.mxu0 0.0
    %522 = vmatpush2.msra.mxu0 0.0
    %523 = vmatprep.subr.mxu0 0.0
    %524 = vmatpush2.msra.mxu0 0.0
    %525 = vmatprep.subr.mxu0 0.0
    %526 = vmatpush2.msra.mxu0 0.0
    %527 = vmatprep.subr.mxu0 0.0
    %528 = vmatpush2.msra.mxu0 0.0
    %529 = vmatprep.subr.mxu0 0.0
    %530 = vmatpush2.msra.mxu0 0.0
    %531 = vmatprep.subr.mxu0 0.0
    %532 = vmatpush2.msra.mxu0 0.0
    %533 = vmatprep.mubr.f32.mxu0 0.0
    %534 = vmatmul.mubr.f32.gmra.mxu0 %v467
    %v535 = vpop.f32.mrf.mxu0
    %v536 = vadd.f32 0.0, %v535
    %v537 = vpop.f32.mrf.mxu0
    %538 = vdwg.mxu0
    %v539 = vsel %vm261, %v321, 0
    %541 = vmatprep.subr.mxu0 0.0
    %542 = vmatpush1.msra.mxu0 0.0
    %543 = vmatprep.subr.mxu0 0.0
    %544 = vmatpush1.msra.mxu0 0.0
    %545 = vmatprep.subr.mxu0 0.0
    %546 = vmatpush1.msra.mxu0 0.0
    %547 = vmatprep.subr.mxu0 0.0
    %548 = vmatpush1.msra.mxu0 0.0
    %549 = vmatprep.subr.mxu0 0.0
    %550 = vmatpush1.msra.mxu0 0.0
    %551 = vmatprep.subr.mxu0 0.0
    %552 = vmatpush1.msra.mxu0 0.0
    %553 = vmatprep.subr.mxu0 0.0
    %554 = vmatpush1.msra.mxu0 0.0
    %555 = vmatprep.subr.mxu0 0.0
    %556 = vmatpush1.msra.mxu0 0.0
    %557 = vmatprep.subr.mxu0 0.0
    %558 = vmatpush1.msra.mxu0 0.0
    %559 = vmatprep.subr.mxu0 0.0
    %560 = vmatpush1.msra.mxu0 0.0
    %561 = vmatprep.subr.mxu0 0.0
    %562 = vmatpush1.msra.mxu0 0.0
    %563 = vmatprep.subr.mxu0 0.0
    %564 = vmatpush1.msra.mxu0 0.0
    %565 = vmatprep.subr.mxu0 0.0
    %566 = vmatpush1.msra.mxu0 0.0
    %567 = vmatprep.subr.mxu0 0.0
    %568 = vmatpush1.msra.mxu0 0.0
    %569 = vmatprep.subr.mxu0 0.0
    %570 = vmatpush1.msra.mxu0 %v52
    %571 = vmatprep.subr.mxu0 0.0
    %572 = vmatpush1.msra.mxu0 %v51
    %573 = vmatprep.subr.mxu0 0.0
    %574 = vmatpush2.msra.mxu0 0.0
    %575 = vmatprep.subr.mxu0 0.0
    %576 = vmatpush2.msra.mxu0 0.0
    %577 = vmatprep.subr.mxu0 0.0
    %578 = vmatpush2.msra.mxu0 0.0
    %579 = vmatprep.subr.mxu0 0.0
    %580 = vmatpush2.msra.mxu0 0.0
    %581 = vmatprep.subr.mxu0 0.0
    %582 = vmatpush2.msra.mxu0 0.0
    %583 = vmatprep.subr.mxu0 0.0
    %584 = vmatpush2.msra.mxu0 0.0
    %585 = vmatprep.subr.mxu0 0.0
    %586 = vmatpush2.msra.mxu0 0.0
    %587 = vmatprep.subr.mxu0 0.0
    %588 = vmatpush2.msra.mxu0 0.0
    %589 = vmatprep.subr.mxu0 0.0
    %590 = vmatpush2.msra.mxu0 0.0
    %591 = vmatprep.subr.mxu0 0.0
    %592 = vmatpush2.msra.mxu0 0.0
    %593 = vmatprep.subr.mxu0 0.0
    %594 = vmatpush2.msra.mxu0 0.0
    %595 = vmatprep.subr.mxu0 0.0
    %596 = vmatpush2.msra.mxu0 0.0
    %597 = vmatprep.subr.mxu0 0.0
    %598 = vmatpush2.msra.mxu0 0.0
    %599 = vmatprep.subr.mxu0 0.0
    %600 = vmatpush2.msra.mxu0 0.0
    %601 = vmatprep.subr.mxu0 0.0
    %602 = vmatpush2.msra.mxu0 0.0
    %603 = vmatprep.subr.mxu0 0.0
    %604 = vmatpush2.msra.mxu0 0.0
    %605 = vmatprep.mubr.f32.mxu0 0.0
    %606 = vmatmul.mubr.f32.gmra.mxu0 %v539
    %v607 = vpop.f32.mrf.mxu0
    %v608 = vadd.f32 0.0, %v607
    %v609 = vpop.f32.mrf.mxu0
    %610 = vdwg.mxu0
    %v611 = vsel %vm261, %v304, 0
    %613 = vmatprep.subr.mxu0 0.0
    %614 = vmatpush1.msra.mxu0 0.0
    %615 = vmatprep.subr.mxu0 0.0
    %616 = vmatpush1.msra.mxu0 0.0
    %617 = vmatprep.subr.mxu0 0.0
    %618 = vmatpush1.msra.mxu0 0.0
    %619 = vmatprep.subr.mxu0 0.0
    %620 = vmatpush1.msra.mxu0 0.0
    %621 = vmatprep.subr.mxu0 0.0
    %622 = vmatpush1.msra.mxu0 0.0
    %623 = vmatprep.subr.mxu0 0.0
    %624 = vmatpush1.msra.mxu0 0.0
    %625 = vmatprep.subr.mxu0 0.0
    %626 = vmatpush1.msra.mxu0 0.0
    %627 = vmatprep.subr.mxu0 0.0
    %628 = vmatpush1.msra.mxu0 0.0
    %629 = vmatprep.subr.mxu0 0.0
    %630 = vmatpush1.msra.mxu0 0.0
    %631 = vmatprep.subr.mxu0 0.0
    %632 = vmatpush1.msra.mxu0 0.0
    %633 = vmatprep.subr.mxu0 0.0
    %634 = vmatpush1.msra.mxu0 0.0
    %635 = vmatprep.subr.mxu0 0.0
    %636 = vmatpush1.msra.mxu0 0.0
    %637 = vmatprep.subr.mxu0 0.0
    %638 = vmatpush1.msra.mxu0 0.0
    %639 = vmatprep.subr.mxu0 0.0
    %640 = vmatpush1.msra.mxu0 0.0
    %641 = vmatprep.subr.mxu0 0.0
    %642 = vmatpush1.msra.mxu0 %v54
    %643 = vmatprep.subr.mxu0 0.0
    %644 = vmatpush1.msra.mxu0 %v53
    %645 = vmatprep.subr.mxu0 0.0
    %646 = vmatpush2.msra.mxu0 0.0
    %647 = vmatprep.subr.mxu0 0.0
    %648 = vmatpush2.msra.mxu0 0.0
    %649 = vmatprep.subr.mxu0 0.0
    %650 = vmatpush2.msra.mxu0 0.0
    %651 = vmatprep.subr.mxu0 0.0
    %652 = vmatpush2.msra.mxu0 0.0
    %653 = vmatprep.subr.mxu0 0.0
    %654 = vmatpush2.msra.mxu0 0.0
    %655 = vmatprep.subr.mxu0 0.0
    %656 = vmatpush2.msra.mxu0 0.0
    %657 = vmatprep.subr.mxu0 0.0
    %658 = vmatpush2.msra.mxu0 0.0
    %659 = vmatprep.subr.mxu0 0.0
    %660 = vmatpush2.msra.mxu0 0.0
    %661 = vmatprep.subr.mxu0 0.0
    %662 = vmatpush2.msra.mxu0 0.0
    %663 = vmatprep.subr.mxu0 0.0
    %664 = vmatpush2.msra.mxu0 0.0
    %665 = vmatprep.subr.mxu0 0.0
    %666 = vmatpush2.msra.mxu0 0.0
    %667 = vmatprep.subr.mxu0 0.0
    %668 = vmatpush2.msra.mxu0 0.0
    %669 = vmatprep.subr.mxu0 0.0
    %670 = vmatpush2.msra.mxu0 0.0
    %671 = vmatprep.subr.mxu0 0.0
    %672 = vmatpush2.msra.mxu0 0.0
    %673 = vmatprep.subr.mxu0 0.0
    %674 = vmatpush2.msra.mxu0 0.0
    %675 = vmatprep.subr.mxu0 0.0
    %676 = vmatpush2.msra.mxu0 0.0
    %677 = vmatprep.mubr.f32.mxu0 0.0
    %678 = vmatmul.mubr.f32.gmra.mxu0 %v611
    %v679 = vpop.f32.mrf.mxu0
    %v680 = vadd.f32 0.0, %v679
    %v681 = vpop.f32.mrf.mxu0
    %682 = vdwg.mxu0
    %v683 = vsel %vm261, %v318, 0
    %685 = vmatprep.subr.mxu0 0.0
    %686 = vmatpush1.msra.mxu0 0.0
    %687 = vmatprep.subr.mxu0 0.0
    %688 = vmatpush1.msra.mxu0 0.0
    %689 = vmatprep.subr.mxu0 0.0
    %690 = vmatpush1.msra.mxu0 0.0
    %691 = vmatprep.subr.mxu0 0.0
    %692 = vmatpush1.msra.mxu0 0.0
    %693 = vmatprep.subr.mxu0 0.0
    %694 = vmatpush1.msra.mxu0 0.0
    %695 = vmatprep.subr.mxu0 0.0
    %696 = vmatpush1.msra.mxu0 0.0
    %697 = vmatprep.subr.mxu0 0.0
    %698 = vmatpush1.msra.mxu0 0.0
    %699 = vmatprep.subr.mxu0 0.0
    %700 = vmatpush1.msra.mxu0 0.0
    %701 = vmatprep.subr.mxu0 0.0
    %702 = vmatpush1.msra.mxu0 0.0
    %703 = vmatprep.subr.mxu0 0.0
    %704 = vmatpush1.msra.mxu0 0.0
    %705 = vmatprep.subr.mxu0 0.0
    %706 = vmatpush1.msra.mxu0 0.0
    %707 = vmatprep.subr.mxu0 0.0
    %708 = vmatpush1.msra.mxu0 0.0
    %709 = vmatprep.subr.mxu0 0.0
    %710 = vmatpush1.msra.mxu0 0.0
    %711 = vmatprep.subr.mxu0 0.0
    %712 = vmatpush1.msra.mxu0 0.0
    %713 = vmatprep.subr.mxu0 0.0
    %714 = vmatpush1.msra.mxu0 %v56
    %715 = vmatprep.subr.mxu0 0.0
    %716 = vmatpush1.msra.mxu0 %v55
    %717 = vmatprep.subr.mxu0 0.0
    %718 = vmatpush2.msra.mxu0 0.0
    %719 = vmatprep.subr.mxu0 0.0
    %720 = vmatpush2.msra.mxu0 0.0
    %721 = vmatprep.subr.mxu0 0.0
    %722 = vmatpush2.msra.mxu0 0.0
    %723 = vmatprep.subr.mxu0 0.0
    %724 = vmatpush2.msra.mxu0 0.0
    %725 = vmatprep.subr.mxu0 0.0
    %726 = vmatpush2.msra.mxu0 0.0
    %727 = vmatprep.subr.mxu0 0.0
    %728 = vmatpush2.msra.mxu0 0.0
    %729 = vmatprep.subr.mxu0 0.0
    %730 = vmatpush2.msra.mxu0 0.0
    %731 = vmatprep.subr.mxu0 0.0
    %732 = vmatpush2.msra.mxu0 0.0
    %733 = vmatprep.subr.mxu0 0.0
    %734 = vmatpush2.msra.mxu0 0.0
    %735 = vmatprep.subr.mxu0 0.0
    %736 = vmatpush2.msra.mxu0 0.0
    %737 = vmatprep.subr.mxu0 0.0
    %738 = vmatpush2.msra.mxu0 0.0
    %739 = vmatprep.subr.mxu0 0.0
    %740 = vmatpush2.msra.mxu0 0.0
    %741 = vmatprep.subr.mxu0 0.0
    %742 = vmatpush2.msra.mxu0 0.0
    %743 = vmatprep.subr.mxu0 0.0
    %744 = vmatpush2.msra.mxu0 0.0
    %745 = vmatprep.subr.mxu0 0.0
    %746 = vmatpush2.msra.mxu0 0.0
    %747 = vmatprep.subr.mxu0 0.0
    %748 = vmatpush2.msra.mxu0 0.0
    %749 = vmatprep.mubr.f32.mxu0 0.0
    %750 = vmatmul.mubr.f32.gmra.mxu0 %v683
    %v751 = vpop.f32.mrf.mxu0
    %v752 = vadd.f32 0.0, %v751
    %v753 = vpop.f32.mrf.mxu0
    %754 = vdwg.mxu0
    %v755 = vsel %vm261, %v320, 0
    %757 = vmatprep.subr.mxu0 0.0
    %758 = vmatpush1.msra.mxu0 0.0
    %759 = vmatprep.subr.mxu0 0.0
    %760 = vmatpush1.msra.mxu0 0.0
    %761 = vmatprep.subr.mxu0 0.0
    %762 = vmatpush1.msra.mxu0 0.0
    %763 = vmatprep.subr.mxu0 0.0
    %764 = vmatpush1.msra.mxu0 0.0
    %765 = vmatprep.subr.mxu0 0.0
    %766 = vmatpush1.msra.mxu0 0.0
    %767 = vmatprep.subr.mxu0 0.0
    %768 = vmatpush1.msra.mxu0 0.0
    %769 = vmatprep.subr.mxu0 0.0
    %770 = vmatpush1.msra.mxu0 0.0
    %771 = vmatprep.subr.mxu0 0.0
    %772 = vmatpush1.msra.mxu0 0.0
    %773 = vmatprep.subr.mxu0 0.0
    %774 = vmatpush1.msra.mxu0 0.0
    %775 = vmatprep.subr.mxu0 0.0
    %776 = vmatpush1.msra.mxu0 0.0
    %777 = vmatprep.subr.mxu0 0.0
    %778 = vmatpush1.msra.mxu0 0.0
    %779 = vmatprep.subr.mxu0 0.0
    %780 = vmatpush1.msra.mxu0 0.0
    %781 = vmatprep.subr.mxu0 0.0
    %782 = vmatpush1.msra.mxu0 0.0
    %783 = vmatprep.subr.mxu0 0.0
    %784 = vmatpush1.msra.mxu0 0.0
    %785 = vmatprep.subr.mxu0 0.0
    %786 = vmatpush1.msra.mxu0 %v58
    %787 = vmatprep.subr.mxu0 0.0
    %788 = vmatpush1.msra.mxu0 %v57
    %789 = vmatprep.subr.mxu0 0.0
    %790 = vmatpush2.msra.mxu0 0.0
    %791 = vmatprep.subr.mxu0 0.0
    %792 = vmatpush2.msra.mxu0 0.0
    %793 = vmatprep.subr.mxu0 0.0
    %794 = vmatpush2.msra.mxu0 0.0
    %795 = vmatprep.subr.mxu0 0.0
    %796 = vmatpush2.msra.mxu0 0.0
    %797 = vmatprep.subr.mxu0 0.0
    %798 = vmatpush2.msra.mxu0 0.0
    %799 = vmatprep.subr.mxu0 0.0
    %800 = vmatpush2.msra.mxu0 0.0
    %801 = vmatprep.subr.mxu0 0.0
    %802 = vmatpush2.msra.mxu0 0.0
    %803 = vmatprep.subr.mxu0 0.0
    %804 = vmatpush2.msra.mxu0 0.0
    %805 = vmatprep.subr.mxu0 0.0
    %806 = vmatpush2.msra.mxu0 0.0
    %807 = vmatprep.subr.mxu0 0.0
    %808 = vmatpush2.msra.mxu0 0.0
    %809 = vmatprep.subr.mxu0 0.0
    %810 = vmatpush2.msra.mxu0 0.0
    %811 = vmatprep.subr.mxu0 0.0
    %812 = vmatpush2.msra.mxu0 0.0
    %813 = vmatprep.subr.mxu0 0.0
    %814 = vmatpush2.msra.mxu0 0.0
    %815 = vmatprep.subr.mxu0 0.0
    %816 = vmatpush2.msra.mxu0 0.0
    %817 = vmatprep.subr.mxu0 0.0
    %818 = vmatpush2.msra.mxu0 0.0
    %819 = vmatprep.subr.mxu0 0.0
    %820 = vmatpush2.msra.mxu0 0.0
    %821 = vmatprep.mubr.f32.mxu0 0.0
    %822 = vmatmul.mubr.f32.gmra.mxu0 %v755
    %v823 = vpop.f32.mrf.mxu0
    %v824 = vadd.f32 0.0, %v823
    %v825 = vpop.f32.mrf.mxu0
    %826 = vdwg.mxu0
    %v827 = vsel %vm261, %v322, 0
    %829 = vmatprep.subr.mxu0 0.0
    %830 = vmatpush1.msra.mxu0 0.0
    %831 = vmatprep.subr.mxu0 0.0
    %832 = vmatpush1.msra.mxu0 0.0
    %833 = vmatprep.subr.mxu0 0.0
    %834 = vmatpush1.msra.mxu0 0.0
    %835 = vmatprep.subr.mxu0 0.0
    %836 = vmatpush1.msra.mxu0 0.0
    %837 = vmatprep.subr.mxu0 0.0
    %838 = vmatpush1.msra.mxu0 0.0
    %839 = vmatprep.subr.mxu0 0.0
    %840 = vmatpush1.msra.mxu0 0.0
    %841 = vmatprep.subr.mxu0 0.0
    %842 = vmatpush1.msra.mxu0 0.0
    %843 = vmatprep.subr.mxu0 0.0
    %844 = vmatpush1.msra.mxu0 0.0
    %845 = vmatprep.subr.mxu0 0.0
    %846 = vmatpush1.msra.mxu0 0.0
    %847 = vmatprep.subr.mxu0 0.0
    %848 = vmatpush1.msra.mxu0 0.0
    %849 = vmatprep.subr.mxu0 0.0
    %850 = vmatpush1.msra.mxu0 0.0
    %851 = vmatprep.subr.mxu0 0.0
    %852 = vmatpush1.msra.mxu0 0.0
    %853 = vmatprep.subr.mxu0 0.0
    %854 = vmatpush1.msra.mxu0 0.0
    %855 = vmatprep.subr.mxu0 0.0
    %856 = vmatpush1.msra.mxu0 0.0
    %857 = vmatprep.subr.mxu0 0.0
    %858 = vmatpush1.msra.mxu0 %v60
    %859 = vmatprep.subr.mxu0 0.0
    %860 = vmatpush1.msra.mxu0 %v59
    %861 = vmatprep.subr.mxu0 0.0
    %862 = vmatpush2.msra.mxu0 0.0
    %863 = vmatprep.subr.mxu0 0.0
    %864 = vmatpush2.msra.mxu0 0.0
    %865 = vmatprep.subr.mxu0 0.0
    %866 = vmatpush2.msra.mxu0 0.0
    %867 = vmatprep.subr.mxu0 0.0
    %868 = vmatpush2.msra.mxu0 0.0
    %869 = vmatprep.subr.mxu0 0.0
    %870 = vmatpush2.msra.mxu0 0.0
    %871 = vmatprep.subr.mxu0 0.0
    %872 = vmatpush2.msra.mxu0 0.0
    %873 = vmatprep.subr.mxu0 0.0
    %874 = vmatpush2.msra.mxu0 0.0
    %875 = vmatprep.subr.mxu0 0.0
    %876 = vmatpush2.msra.mxu0 0.0
    %877 = vmatprep.subr.mxu0 0.0
    %878 = vmatpush2.msra.mxu0 0.0
    %879 = vmatprep.subr.mxu0 0.0
    %880 = vmatpush2.msra.mxu0 0.0
    %881 = vmatprep.subr.mxu0 0.0
    %882 = vmatpush2.msra.mxu0 0.0
    %883 = vmatprep.subr.mxu0 0.0
    %884 = vmatpush2.msra.mxu0 0.0
    %885 = vmatprep.subr.mxu0 0.0
    %886 = vmatpush2.msra.mxu0 0.0
    %887 = vmatprep.subr.mxu0 0.0
    %888 = vmatpush2.msra.mxu0 0.0
    %889 = vmatprep.subr.mxu0 0.0
    %890 = vmatpush2.msra.mxu0 0.0
    %891 = vmatprep.subr.mxu0 0.0
    %892 = vmatpush2.msra.mxu0 0.0
    %893 = vmatprep.mubr.f32.mxu0 0.0
    %894 = vmatmul.mubr.f32.gmra.mxu0 %v827
    %v895 = vpop.f32.mrf.mxu0
    %v896 = vadd.f32 0.0, %v895
    %v897 = vpop.f32.mrf.mxu0
    %898 = vdwg.mxu0
    %v907 = vrot.slane %v464, 7
    %v908 = vsel %vm245, %v907, %v392
    %v909 = vrot.slane %v536, 6
    %v910 = vsel %vm247, %v909, %v908
    %v911 = vrot.slane %v608, 5
    %v912 = vsel %vm249, %v911, %v910
    %v913 = vrot.slane %v680, 4
    %v914 = vsel %vm251, %v913, %v912
    %v915 = vrot.slane %v752, 3
    %v916 = vsel %vm253, %v915, %v914
    %v917 = vrot.slane %v824, 2
    %v918 = vsel %vm255, %v917, %v916
    %v919 = vrot.slane %v896, 1
    %v920 = vsel %vm257, %v919, %v918
    %922 = vst.msk [vmem:[#allocation8] sm:$0xff] %vm85, %v920
    // Predicated region
    $region26: #{tpu_custom_call.1} parent=1 // pred_check
      _
    $region27: #{tpu_custom_call.1} parent=1 // pred_check_branch
      %924 = sbr.rel (0) target = $region29
    $region28: #{tpu_custom_call.1} parent=1 // pred_region
      %s926 = ssub.s32 128, 128
      %927 = vsyncadd [#allocation5], %s926
      %s929 = sshll.u32 [#allocation8], 4
      %s930 = int_to_ptr.vmem [resolvable:$true] %s929
      %932 = dma.vmem_to_hbm [thread:$0]  %s930, 128, %s4, [#allocation5]
    $region29: #{tpu_custom_call.1} parent=1 // pred_fallthru
      _
    // Predicated region
    $region30: #{tpu_custom_call.1} parent=1 // pred_check
      _
    $region31: #{tpu_custom_call.1} parent=1 // pred_check_branch
      %934 = sbr.rel (0) target = $region33
    $region32: #{tpu_custom_call.1} parent=1 // pred_region
      %935 = dma.done [#allocation5], 128
    $region33: #{tpu_custom_call.1} parent=1 // pred_fallthru
      _
    %936 = vsyncpa [#allocation4], 1
    %937 = vsyncpa [#allocation7], 1
    %938 = vsyncpa [#allocation5], 1

</llo_original>
